<compile_context>
chip_gen: v5e
topology: v5e:2x2
jax: 0.10.0
libtpu: 0.0.40
codegen_flags: <defaults>
</compile_context>

<pallas_src>
import functools

import jax
import jax.numpy as jnp
from jax.experimental import pallas as pl
from jax.experimental.pallas import tpu as pltpu

# jax-version compatibility for the Mosaic compiler-params object.
_CompilerParams = getattr(pltpu, "CompilerParams", None) or getattr(
    pltpu, "TPUCompilerParams"
)


# ----------------------------------------------------------------------------
# Pallas kernels: the elementwise masking hot path (specialized variants).
# ----------------------------------------------------------------------------
def _masker_kernel_temporal(seqs_ref, tmask_ref, embed_ref, out_ref):
    """seqs[temporal_mask] = embed   (spatial masking disabled)."""
    tmask = tmask_ref[...] != 0                      # (1, TS, 1) bool
    out_ref[...] = jnp.where(tmask, embed_ref[...], seqs_ref[...]).astype(
        out_ref.dtype
    )


def _masker_kernel_temporal_spatial(seqs_ref, tmask_ref, smask_ref, embed_ref,
                                    out_ref):
    """seqs[temporal_mask] = embed; then seqs[spatial_mask] = 0."""
    tmask = tmask_ref[...] != 0                      # (1, TS, 1) bool
    smask = smask_ref[...] != 0                      # (1, 1,  M) bool
    masked = jnp.where(tmask, embed_ref[...], seqs_ref[...])
    zero = jnp.zeros((), dtype=out_ref.dtype)
    out_ref[...] = jnp.where(smask, zero, masked).astype(out_ref.dtype)


# ----------------------------------------------------------------------------
# Tile-size / VMEM-budget heuristics (generation aware).
# ----------------------------------------------------------------------------
_MIN_TILE = 32                       # multiple of 32: valid block dim for int8 masks
_TARGET_BLOCK_MAX = 8 * 1024 * 1024  # review: aim at 4-8 MiB seqs blocks
_TARGET_BLOCK_MIN = 1 * 1024 * 1024


def _vmem_capacity_bytes():
    try:
        return int(pltpu.get_tpu_info().vmem_capacity_bytes)
    except Exception:
        return 64 * 1024 * 1024      # conservative: v7x per-TensorCore VMEM


def _round_down_tile(t):
    return max(_MIN_TILE, (t // _MIN_TILE) * _MIN_TILE)


def _round_up_tile(t):
    return max(_MIN_TILE, -(-t // _MIN_TILE) * _MIN_TILE)


def _choose_seq_tile(n, s, m, itemsize, vmem_cap):
    """Pick a sequence tile so the double-buffered (in + aliased out) seqs
    blocks plus int8 mask buffers fit ~70% of this generation's VMEM, aiming
    for 4-8 MiB seqs blocks to amortize the ~0.35us per-grid-step overhead."""
    budget = int(0.70 * vmem_cap)
    row_bytes = max(1, m * itemsize)
    target_block = min(_TARGET_BLOCK_MAX, max(_TARGET_BLOCK_MIN, budget // 5))
    ts = _round_down_tile(target_block // row_bytes)
    ts = min(ts, s)

    def working_set(t):
        # 2x double-buffered input + 2x output seqs blocks, 2x int8 mask
        # buffers (lane-padded to 128), embed/spatial-mask blocks and slack.
        return 4 * t * row_bytes + 2 * t * 128 + 256 * 1024

    while ts > _MIN_TILE and working_set(ts) > budget:
        ts = _round_down_tile(ts // 2)

    if ts < s:
        # Prefer a tile that divides S exactly: avoids a short remainder tile
        # and masked partial writebacks on the aliased output.
        cand = ts
        while cand >= _MIN_TILE and s % cand != 0:
            cand -= _MIN_TILE
        if cand >= max(_MIN_TILE, ts // 2):
            ts = cand

    # Megacore balance (v7x has 2 TensorCores): keep >= 2 grid steps if possible.
    if n * -(-s // max(ts, 1)) < 2 and s >= 2 * _MIN_TILE:
        ts = min(ts, _round_up_tile(-(-s // 2)))

    return max(1, min(ts, s))


# ----------------------------------------------------------------------------
# Hot path: apply temporal (and optional spatial) mask with pallas_call.
# ----------------------------------------------------------------------------
def _apply_masks_pallas(seqs, tmask_i8, embed, smask_i8=None, *, seq_tile=None):
    """seqs: (N,S,M); tmask_i8: (N,S,1) int8 {0,1}; smask_i8: (N,1,M) int8 or
    None; embed: (1,1,M) in seqs dtype.  Output aliases the seqs buffer; the
    alias only becomes a true in-place update when the caller donates seqs
    (jax.jit(..., donate_argnums=...))."""
    n, s, m = seqs.shape
    itemsize = jnp.dtype(seqs.dtype).itemsize
    vmem_cap = _vmem_capacity_bytes()

    if seq_tile is None:
        ts = _choose_seq_tile(n, s, m, itemsize, vmem_cap)
    else:
        ts = int(seq_tile)
        if ts < s:
            ts = _round_down_tile(ts)
        ts = max(1, min(ts, s))

    grid = (n, pl.cdiv(s, ts))

    seqs_spec = pl.BlockSpec((1, ts, m), lambda i, j: (i, j, 0))
    tmask_spec = pl.BlockSpec((1, ts, 1), lambda i, j: (i, j, 0))
    embed_spec = pl.BlockSpec((1, 1, m), lambda i, j: (0, 0, 0))

    # Generation-aware scoped-VMEM limit: cover the double-buffered working set
    # with headroom, never above ~85% of physical VMEM.
    working = 4 * ts * m * itemsize + 2 * ts * 128 + 2 * m * itemsize + 256 * 1024
    vmem_limit = int(
        min(max(int(0.85 * vmem_cap), 32 * 1024 * 1024),
            max(32 * 1024 * 1024, int(working * 1.5)))
    )

    compiler_params = _CompilerParams(
        dimension_semantics=("parallel", "parallel"),
        vmem_limit_bytes=vmem_limit,
    )

    if smask_i8 is None:
        return pl.pallas_call(
            _masker_kernel_temporal,
            out_shape=jax.ShapeDtypeStruct((n, s, m), seqs.dtype),
            grid=grid,
            in_specs=[seqs_spec, tmask_spec, embed_spec],
            out_specs=seqs_spec,
            compiler_params=compiler_params,
            input_output_aliases={0: 0},          # in-place when seqs is donated
        )(seqs, tmask_i8, embed)

    smask_spec = pl.BlockSpec((1, 1, m), lambda i, j: (i, 0, 0))
    return pl.pallas_call(
        _masker_kernel_temporal_spatial,
        out_shape=jax.ShapeDtypeStruct((n, s, m), seqs.dtype),
        grid=grid,
        in_specs=[seqs_spec, tmask_spec, smask_spec, embed_spec],
        out_specs=seqs_spec,
        compiler_params=compiler_params,
        input_output_aliases={0: 0},              # in-place when seqs is donated
    )(seqs, tmask_i8, smask_i8, embed)


# ----------------------------------------------------------------------------
# compute_row_mask equivalent (random span mask) -- plain JAX glue.
# ----------------------------------------------------------------------------
def compute_row_mask(key, shape, span_len, max_mask_prob, row_lens=None,
                     min_num_spans=2):
    """Bool mask of `shape` = (num_rows, row_width): each row gets
    ~max_mask_prob of its valid positions covered by random spans of length
    `span_len` (spans may overlap, so effective coverage is lower).
    # TODO(synk): fairseq2's compute_row_mask samples span starts without
    # replacement; this draws with replacement, so coverage statistics differ
    # slightly (functionally equivalent random masking)."""
    num_rows, row_width = shape
    if row_lens is None:
        row_lens = jnp.full((num_rows,), row_width, dtype=jnp.int32)
    row_lens = row_lens.astype(jnp.int32)

    num_spans = jnp.maximum(
        jnp.int32(min_num_spans),
        (max_mask_prob * row_lens.astype(jnp.float32) / span_len).astype(jnp.int32),
    )
    max_spans = max(min_num_spans, int(max_mask_prob * row_width / span_len) + 1)

    hi = jnp.maximum(row_lens[:, None] - span_len, 1)
    starts = jax.random.randint(key, (num_rows, max_spans), 0, hi)   # (N, K)

    pos = jnp.arange(row_width)[None, None, :]                       # (1, 1, W)
    st = starts[:, :, None]                                          # (N, K, 1)
    span_hits = (pos >= st) & (pos < st + span_len)                  # (N, K, W)
    span_valid = (jnp.arange(max_spans)[None, :] < num_spans[:, None])[:, :, None]
    mask = jnp.any(span_hits & span_valid, axis=1)                   # (N, W)
    mask = mask & (jnp.arange(row_width)[None, :] < row_lens[:, None])
    return mask


# ----------------------------------------------------------------------------
# StandardWav2Vec2Masker forward (functional).
# ----------------------------------------------------------------------------
def standard_wav2vec2_masker(
    seqs,                     # (N, S, M)
    seq_lens,                 # (N,) or None
    temporal_mask_embed,      # (M,)
    key,
    *,
    temporal_span_len=10,
    max_temporal_mask_prob=0.65,
    min_num_temporal_mask_spans=2,
    spatial_span_len=10,
    max_spatial_mask_prob=0.0,
    min_num_spatial_mask_spans=2,
    seq_tile=None,
):
    n, s, m = seqs.shape
    k_t, k_s = jax.random.split(key)

    temporal_mask = compute_row_mask(
        k_t, (n, s), temporal_span_len, max_temporal_mask_prob,
        row_lens=seq_lens, min_num_spans=min_num_temporal_mask_spans,
    )                                                        # (N, S) bool

    tmask_i8 = temporal_mask.astype(jnp.int8)[:, :, None]    # (N, S, 1) int8
    embed = temporal_mask_embed.astype(seqs.dtype).reshape(1, 1, m)

    if max_spatial_mask_prob > 0.0:
        spatial_mask = compute_row_mask(
            k_s, (n, m), spatial_span_len, max_spatial_mask_prob,
            row_lens=None, min_num_spans=min_num_spatial_mask_spans,
        )                                                    # (N, M) bool
        smask_i8 = spatial_mask.astype(jnp.int8)[:, None, :]
        masked_seqs = _apply_masks_pallas(
            seqs, tmask_i8, embed, smask_i8, seq_tile=seq_tile)
    else:
        masked_seqs = _apply_masks_pallas(
            seqs, tmask_i8, embed, None, seq_tile=seq_tile)

    return masked_seqs, temporal_mask


# ----------------------------------------------------------------------------
# Demo / self-test.
# ----------------------------------------------------------------------------
if __name__ == "__main__":
    key = jax.random.PRNGKey(0)
    k_param, k_seq, k_mask, k_mask2, k_seq3, k_mask3 = jax.random.split(key, 6)

    # Small shapes consistent with the module: batch=2, seq=64, model_dim=32.
    batch, seq_len, model_dim = 2, 64, 32

    seqs = jax.random.normal(k_seq, (batch, seq_len, model_dim), dtype=jnp.float32)
    seq_lens = jnp.array([64, 48], dtype=jnp.int32)

    # Parameter init matches nn.init.uniform_ (U[0, 1)) on shape (model_dim,).
    temporal_mask_embed = jax.random.uniform(k_param, (model_dim,), dtype=jnp.float32)

    # ---- 1) default config (no spatial masking): explicit tile -> S tiled grid
    masked_seqs, temporal_mask = standard_wav2vec2_masker(
        seqs, seq_lens, temporal_mask_embed, k_mask,
        temporal_span_len=10,
        max_temporal_mask_prob=0.65,
        min_num_temporal_mask_spans=2,
        spatial_span_len=10,
        max_spatial_mask_prob=0.0,
        min_num_spatial_mask_spans=2,
        seq_tile=32,                         # two sequence tiles per batch row
    )
    jax.block_until_ready((masked_seqs, temporal_mask))

    ref = jnp.where(temporal_mask[:, :, None],
                    temporal_mask_embed[None, None, :], seqs)
    assert masked_seqs.shape == seqs.shape
    assert temporal_mask.shape == (batch, seq_len)
    assert jnp.allclose(masked_seqs, ref, atol=1e-6)
    # Padded positions are never temporally masked.
    assert not bool(jnp.any(temporal_mask[1, 48:]))

    # ---- 2) spatial masking enabled + real buffer donation (in-place masking)
    @functools.partial(jax.jit, donate_argnums=(0,))
    def masker_spatial(seqs_in, lens, embed, k):
        return standard_wav2vec2_masker(
            seqs_in, lens, embed, k,
            max_spatial_mask_prob=0.25, seq_tile=None)   # auto, VMEM-budgeted tile

    seqs_donated = jnp.copy(seqs)            # donate a private copy; `seqs` stays live
    masked_seqs2, temporal_mask2 = masker_spatial(
        seqs_donated, seq_lens, temporal_mask_embed, k_mask2)
    jax.block_until_ready((masked_seqs2, temporal_mask2))
    del seqs_donated                         # donated buffer: never read it again

    # Recompute the same masks (same key split as inside the wrapper).
    k_t2, k_s2 = jax.random.split(k_mask2)
    spatial_mask2 = compute_row_mask(k_s2, (batch, model_dim), 10, 0.25,
                                     row_lens=None, min_num_spans=2)
    ref2 = jnp.where(temporal_mask2[:, :, None],
                     temporal_mask_embed[None, None, :], seqs)
    ref2 = jnp.where(spatial_mask2[:, None, :], 0.0, ref2)
    assert jnp.allclose(masked_seqs2, ref2, atol=1e-6)

    # ---- 3) non-divisible S: remainder tile must not clobber neighbouring rows
    seq_len3 = 40
    seqs3 = jax.random.normal(k_seq3, (batch, seq_len3, model_dim), dtype=jnp.float32)
    seq_lens3 = jnp.array([40, 33], dtype=jnp.int32)
    masked_seqs3, temporal_mask3 = standard_wav2vec2_masker(
        seqs3, seq_lens3, temporal_mask_embed, k_mask3,
        max_spatial_mask_prob=0.0, seq_tile=32)   # 40 = 32 + 8 (remainder tile)
    jax.block_until_ready((masked_seqs3, temporal_mask3))
    ref3 = jnp.where(temporal_mask3[:, :, None],
                     temporal_mask_embed[None, None, :], seqs3)
    assert masked_seqs3.shape == seqs3.shape
    assert jnp.allclose(masked_seqs3, ref3, atol=1e-6)
    assert not bool(jnp.any(temporal_mask3[1, 33:]))

    print("KERNEL_OK")
</pallas_src>

<mosaic_0001>
module attributes {stable_mosaic.version = 11 : i64} {
  func.func @_masker_kernel_temporal(%arg0: i32, %arg1: i32, %arg2: memref<1x32x32xf32, #tpu.memory_space<vmem>>, %arg3: memref<1x32x1xi8, #tpu.memory_space<vmem>>, %arg4: memref<1x1x32xf32, #tpu.memory_space<vmem>>, %arg5: memref<1x32x32xf32, #tpu.memory_space<vmem>>) attributes {dimension_semantics = [#tpu.dimension_semantics<parallel>, #tpu.dimension_semantics<parallel>], iteration_bounds = array<i64: 2, 2>, scalar_prefetch = 0 : i64, scratch_operands = 0 : i64, tpu.core_type = #tpu.core_type<tc>, window_params = [{transform_indices = @transform_0, window_bounds = array<i64: 1, 32, 32>}, {transform_indices = @transform_1, window_bounds = array<i64: 1, 32, 1>}, {pipeline_mode = #tpu.pipeline_mode<synchronous>, transform_indices = @transform_2, window_bounds = array<i64: 1, 1, 32>}, {transform_indices = @transform_3, window_bounds = array<i64: 1, 32, 32>}]} {
    %c0 = arith.constant 0 : index
    %c0_0 = arith.constant 0 : index
    %c0_1 = arith.constant 0 : index
    %0 = vector.load %arg3[%c0, %c0_0, %c0_1] : memref<1x32x1xi8, #tpu.memory_space<vmem>>, vector<1x32x1xi8>
    %c0_i8 = arith.constant 0 : i8
    %1 = vector.broadcast %c0_i8 : i8 to vector<1x32x1xi8>
    %2 = arith.cmpi ne, %0, %1 : vector<1x32x1xi8>
    %c0_2 = arith.constant 0 : index
    %c0_3 = arith.constant 0 : index
    %c0_4 = arith.constant 0 : index
    %3 = vector.load %arg4[%c0_2, %c0_3, %c0_4] : memref<1x1x32xf32, #tpu.memory_space<vmem>>, vector<1x1x32xf32>
    %c0_5 = arith.constant 0 : index
    %c0_6 = arith.constant 0 : index
    %c0_7 = arith.constant 0 : index
    %4 = vector.load %arg2[%c0_5, %c0_6, %c0_7] : memref<1x32x32xf32, #tpu.memory_space<vmem>>, vector<1x32x32xf32>
    %5 = vector.shape_cast %2 : vector<1x32x1xi1> to vector<1x32x1xi1>
    %6 = vector.broadcast %5 : vector<1x32x1xi1> to vector<1x32x32xi1>
    %7 = vector.shape_cast %3 : vector<1x1x32xf32> to vector<1x1x32xf32>
    %8 = vector.broadcast %7 : vector<1x1x32xf32> to vector<1x32x32xf32>
    %9 = arith.select %6, %8, %4 : vector<1x32x32xi1>, vector<1x32x32xf32>
    %c0_8 = arith.constant 0 : index
    %c0_9 = arith.constant 0 : index
    %c0_10 = arith.constant 0 : index
    %10 = vector.load %arg5[%c0_8, %c0_9, %c0_10] : memref<1x32x32xf32, #tpu.memory_space<vmem>>, vector<1x32x32xf32>
    tpu.vector_store %arg5[%c0_8, %c0_9, %c0_10], %9 {strides = array<i32>} : memref<1x32x32xf32, #tpu.memory_space<vmem>>, vector<1x32x32xf32>,
    return
  }
  func.func @transform_0(%arg0: i32, %arg1: i32) -> (i32, i32, i32) {
    %c0_i32 = arith.constant 0 : i32
    %c0_i32_0 = arith.constant 0 : i32
    return %arg0, %arg1, %c0_i32 : i32, i32, i32
  }
  func.func @transform_1(%arg0: i32, %arg1: i32) -> (i32, i32, i32) {
    %c0_i32 = arith.constant 0 : i32
    %c0_i32_0 = arith.constant 0 : i32
    return %arg0, %arg1, %c0_i32 : i32, i32, i32
  }
  func.func @transform_2(%arg0: i32, %arg1: i32) -> (i32, i32, i32) {
    %c0_i32 = arith.constant 0 : i32
    %c0_i32_0 = arith.constant 0 : i32
    %c0_i32_1 = arith.constant 0 : i32
    %c0_i32_2 = arith.constant 0 : i32
    return %c0_i32, %c0_i32_0, %c0_i32_1 : i32, i32, i32
  }
  func.func @transform_3(%arg0: i32, %arg1: i32) -> (i32, i32, i32) {
    %c0_i32 = arith.constant 0 : i32
    %c0_i32_0 = arith.constant 0 : i32
    return %arg0, %arg1, %c0_i32 : i32, i32, i32
  }
}

</mosaic_0001>

<llo_original>
// kernel: tpu_custom_call.1
$region0: #{tpu_custom_call.1}
  #allocation0 [shape = 'u32[]', space=smem, size = 0x4, offset = 0x4, fixed_abs, tag = 'smem constant byte address 0x4 - core index']
  #allocation1 [shape = 'u32[72,128]{1,0:T(1,128)}', space=vmem, size = 0x9000, scoped, tag = 'internal scratch']
  %s0 = inlined_call_operand.vmem [shape: f32[2,64,32], index: 0, kind: input, shape index: {}, may-alias: {0,3}]
  %s1 = inlined_call_operand.vmem [shape: s8[2,64,1], index: 1, kind: input, shape index: {}]
  %s2 = inlined_call_operand.vmem [shape: f32[1,1,32], index: 2, kind: input, shape index: {}]
  %s3 = inlined_call_operand.vmem [shape: f32[2,64,32], index: 3, kind: output, shape index: {}, may-alias: {0,3}]
  %s4 = sld [smem:[#allocation0]]
  $region45: #{tpu_custom_call.1} parent=0
    _
  %s6 = ssub.s32 1, %s4
  %s7 = scalar_select 0, %s6, %s4
  loop: start=0, step=1, limit=6
  $region2: #{tpu_custom_call.1} parent=0 // loop_pre_header
    _
  $region3: #{tpu_custom_call.1} parent=0 // loop_header
    %s9 = sphi 0, %s13
    %p10 = scmp.ge.s32.totalorder %s9, 6
    %s16 = sphi 0, %s28
    %s17 = sphi 0, %s24
    %s18 = sphi 0, %s16
    %s19 = sphi 0, %s17
    %s20 = sphi 0, %s18
    %s21 = sphi 0, %s19
    %s33 = sphi 0, %s35
    %s36 = sphi 0, %s33
    %s37 = sphi 0, %s36
    %s53 = sphi 0, %s37
    %s61 = sphi 0, %s63
    %s64 = sphi 0, %s61
    %s65 = sphi 0, %s64
    %s81 = sphi 0, %s65
    %s85 = sphi 0, %s85
    %s87 = sphi 0, %s85
    %s88 = sphi 0, %s87
    %s102 = sphi 0, %s88
    %s110 = sphi 0, %s112
    %s113 = sphi 0, %s110
    %s114 = sphi 0, %s113
    %s130 = sphi 0, %s114
  $region4: #{tpu_custom_call.1} parent=0 // loop_header_branch
    %12 = sbr.rel (%p10) target = $region8
  $region5: #{tpu_custom_call.1} parent=0 // loop_body
    %s14 = ssub.s32 %s9, 1
    %s15 = ssub.s32 %s9, 2
    %s22 = sadd.s32 1, %s17
    %p23 = scmp.ge.s32.totalorder %s22, 2
    %s24 = scalar_select %p23, 0, %s22
    %s25 = sadd.s32 1, %s16
    %s26 = scalar_select %p23, %s25, %s16
    %p27 = scmp.ge.s32.totalorder %s26, 2
    %s28 = scalar_select %p27, 0, %s26
    %s29 = ssub.s32 %s16, %s28
    %s30 = ssub.s32 %s17, %s24
    %s31 = sor.u32 %s29, %s30
    %p32 = scmp.eq.s32.totalorder %s31, 0
    %s34 = sadd.s32 %s33, 1
    %s35 = scalar_select %p32, %s33, %s34
    %p38 = pneg %p32
    %p39 = scmp.eq.s32.totalorder %s9, 3
    %p40 = por %p38, %p39
    %p41 = scmp.ne.s32.totalorder %s33, %s36
    %p42 = scmp.eq.s32.totalorder %s9, 0
    %p43 = por %p41, %p42
    %p44 = scmp.ne.s32.totalorder %s33, %s36
    %p45 = scmp.eq.s32.totalorder %s14, 3
    %p46 = por %p44, %p45
    %p47 = scmp.ne.s32.totalorder %s36, %s37
    %p48 = scmp.eq.s32.totalorder %s14, 0
    %p49 = por %p47, %p48
    %p50 = scmp.ne.s32.totalorder %s36, %s37
    %p51 = scmp.eq.s32.totalorder %s15, 3
    %p52 = por %p50, %p51
    %p54 = scmp.ne.s32.totalorder %s37, %s53
    %p55 = scmp.eq.s32.totalorder %s15, 0
    %p56 = por %p54, %p55
    %s57 = ssub.s32 %s16, %s28
    %s58 = ssub.s32 %s17, %s24
    %s59 = sor.u32 %s57, %s58
    %p60 = scmp.eq.s32.totalorder %s59, 0
    %s62 = sadd.s32 %s61, 1
    %s63 = scalar_select %p60, %s61, %s62
    %p66 = pneg %p60
    %p67 = scmp.eq.s32.totalorder %s9, 3
    %p68 = por %p66, %p67
    %p69 = scmp.ne.s32.totalorder %s61, %s64
    %p70 = scmp.eq.s32.totalorder %s9, 0
    %p71 = por %p69, %p70
    %p72 = scmp.ne.s32.totalorder %s61, %s64
    %p73 = scmp.eq.s32.totalorder %s14, 3
    %p74 = por %p72, %p73
    %p75 = scmp.ne.s32.totalorder %s64, %s65
    %p76 = scmp.eq.s32.totalorder %s14, 0
    %p77 = por %p75, %p76
    %p78 = scmp.ne.s32.totalorder %s64, %s65
    %p79 = scmp.eq.s32.totalorder %s15, 3
    %p80 = por %p78, %p79
    %p82 = scmp.ne.s32.totalorder %s65, %s81
    %p83 = scmp.eq.s32.totalorder %s15, 0
    %p84 = por %p82, %p83
    %s86 = sadd.s32 %s85, 1
    %p89 = scmp.eq.s32.totalorder %s9, 3
    %p90 = scmp.ne.s32.totalorder %s85, %s87
    %p91 = scmp.eq.s32.totalorder %s9, 0
    %p92 = por %p90, %p91
    %p93 = scmp.ne.s32.totalorder %s85, %s87
    %p94 = scmp.eq.s32.totalorder %s14, 3
    %p95 = por %p93, %p94
    %p96 = scmp.ne.s32.totalorder %s87, %s88
    %p97 = scmp.eq.s32.totalorder %s14, 0
    %p98 = por %p96, %p97
    %p99 = scmp.ne.s32.totalorder %s87, %s88
    %p100 = scmp.eq.s32.totalorder %s15, 3
    %p101 = por %p99, %p100
    %p103 = scmp.ne.s32.totalorder %s88, %s102
    %p104 = scmp.eq.s32.totalorder %s15, 0
    %p105 = por %p103, %p104
    %s106 = ssub.s32 %s16, %s28
    %s107 = ssub.s32 %s17, %s24
    %s108 = sor.u32 %s106, %s107
    %p109 = scmp.eq.s32.totalorder %s108, 0
    %s111 = sadd.s32 %s110, 1
    %s112 = scalar_select %p109, %s110, %s111
    %p115 = pneg %p109
    %p116 = scmp.eq.s32.totalorder %s9, 3
    %p117 = por %p115, %p116
    %p118 = scmp.ne.s32.totalorder %s110, %s113
    %p119 = scmp.eq.s32.totalorder %s9, 0
    %p120 = por %p118, %p119
    %p121 = scmp.ne.s32.totalorder %s110, %s113
    %p122 = scmp.eq.s32.totalorder %s14, 3
    %p123 = por %p121, %p122
    %p124 = scmp.ne.s32.totalorder %s113, %s114
    %p125 = scmp.eq.s32.totalorder %s14, 0
    %p126 = por %p124, %p125
    %p127 = scmp.ne.s32.totalorder %s113, %s114
    %p128 = scmp.eq.s32.totalorder %s15, 3
    %p129 = por %p127, %p128
    %p131 = scmp.ne.s32.totalorder %s114, %s130
    %p132 = scmp.eq.s32.totalorder %s15, 0
    %p133 = por %p131, %p132
    %p134 = scmp.le.s32.totalorder 1, %s9
    %p135 = scmp.lt.s32.totalorder %s9, 5
    %p136 = pnand %p134, %p135
    %p137 = pneg %p136
    // Predicated region
    $region9: #{tpu_custom_call.1} parent=5 // pred_check
      _
    $region10: #{tpu_custom_call.1} parent=5 // pred_check_branch
      %139 = sbr.rel (%p136) target = $region12
    $region11: #{tpu_custom_call.1} parent=5 // pred_region
      %s140 = ssub.s32 %s9, 1
      // Predicated region
      $region13: #{tpu_custom_call.1} parent=11 // pred_check
        %p141 = pneg %p98
      $region14: #{tpu_custom_call.1} parent=11 // pred_check_branch
        %143 = sbr.rel (%p141) target = $region16
      $region15: #{tpu_custom_call.1} parent=11 // pred_region
        _
      $region16: #{tpu_custom_call.1} parent=11 // pred_fallthru
        _
    $region12: #{tpu_custom_call.1} parent=5 // pred_fallthru
      _
    %p144 = scmp.lt.s32.totalorder %s9, 4
    // Predicated region
    $region17: #{tpu_custom_call.1} parent=5 // pred_check
      %p145 = pneg %p144
    $region18: #{tpu_custom_call.1} parent=5 // pred_check_branch
      %147 = sbr.rel (%p145) target = $region20
    $region19: #{tpu_custom_call.1} parent=5 // pred_region
      // Predicated region
      $region21: #{tpu_custom_call.1} parent=19 // pred_check
        %p148 = pneg %p43
      $region22: #{tpu_custom_call.1} parent=19 // pred_check_branch
        %150 = sbr.rel (%p148) target = $region24
      $region23: #{tpu_custom_call.1} parent=19 // pred_region
        %s151 = smul.u32 4, %s17
        %p152 = scmp.lt.s32.totalorder %s16, 1
        %s153 = scalar_select %p152, %s16, 1
        %p154 = scmp.lt.s32.totalorder %s151, 7
        %s155 = scalar_select %p154, %s151, 7
        %s156 = smul.addr %s153, 8
        %s157 = sadd.s32 %s155, %s156
        %s158 = smul.addr %s157, 8
        %s159 = scalar_lea.vmem %s0, %s158
        %s160 = smul.u32 4, %s17
      $region24: #{tpu_custom_call.1} parent=19 // pred_fallthru
        _
      // Predicated region
      $region25: #{tpu_custom_call.1} parent=19 // pred_check
        %p161 = pneg %p71
      $region26: #{tpu_custom_call.1} parent=19 // pred_check_branch
        %163 = sbr.rel (%p161) target = $region28
      $region27: #{tpu_custom_call.1} parent=19 // pred_region
        %s164 = smul.u32 4, %s17
        %p165 = scmp.lt.s32.totalorder %s16, 1
        %s166 = scalar_select %p165, %s16, 1
        %p167 = scmp.lt.s32.totalorder %s164, 7
        %s168 = scalar_select %p167, %s164, 7
        %s169 = smul.addr %s166, 8
        %s170 = sadd.s32 %s168, %s169
        %s171 = smul.addr %s170, 2
        %s172 = scalar_lea.vmem %s1, %s171
        %s173 = smul.u32 4, %s17
      $region28: #{tpu_custom_call.1} parent=19 // pred_fallthru
        _
    $region20: #{tpu_custom_call.1} parent=5 // pred_fallthru
      _
    %p174 = scmp.le.s32.totalorder 1, %s9
    %p175 = scmp.lt.s32.totalorder %s9, 5
    %p176 = pnand %p174, %p175
    %p177 = pneg %p176
    // Predicated region
    $region29: #{tpu_custom_call.1} parent=5 // pred_check
      _
    $region30: #{tpu_custom_call.1} parent=5 // pred_check_branch
      %179 = sbr.rel (%p176) target = $region32
    $region31: #{tpu_custom_call.1} parent=5 // pred_region
      %s180 = ssub.s32 %s9, 1
      %s181 = smul.u32 4, %s19
      %p182 = scmp.lt.s32.totalorder %s18, 1
      %s183 = scalar_select %p182, %s18, 1
      %p184 = scmp.lt.s32.totalorder %s181, 7
      %s185 = scalar_select %p184, %s181, 7
      %s186 = smul.addr %s183, 8
      %s187 = sadd.s32 %s185, %s186
      %s188 = smul.addr %s187, 8
      %s189 = scalar_lea.vmem %s0, %s188
      %p190 = pneg %p49
      %p191 = pneg %p46
      %s192 = smul.u32 4, %s19
      %p193 = scmp.lt.s32.totalorder %s18, 1
      %s194 = scalar_select %p193, %s18, 1
      %p195 = scmp.lt.s32.totalorder %s192, 7
      %s196 = scalar_select %p195, %s192, 7
      %s197 = smul.addr %s194, 8
      %s198 = sadd.s32 %s196, %s197
      %s199 = smul.addr %s198, 2
      %s200 = scalar_lea.vmem %s1, %s199
      %p201 = pneg %p77
      %p202 = pneg %p74
      %p203 = pneg %p98
      %p204 = pneg %p95
      %p205 = pneg %p126
      %p206 = pneg %p123
      %s207 = smul.u32 4, %s19
      %p208 = scmp.lt.s32.totalorder %s18, 1
      %s209 = scalar_select %p208, %s18, 1
      %p210 = scmp.lt.s32.totalorder %s207, 7
      %s211 = scalar_select %p210, %s207, 7
      %s212 = smul.addr %s209, 8
      %s213 = sadd.s32 %s211, %s212
      %s214 = smul.addr %s213, 8
      %s215 = scalar_lea.vmem %s3, %s214
      %s216 = smul.u32 4, %s19
      %p217 = scmp.lt.s32.totalorder %s18, 1
      %s218 = scalar_select %p217, %s18, 1
      %p219 = scmp.lt.s32.totalorder %s216, 7
      %s220 = scalar_select %p219, %s216, 7
      %s221 = smul.addr %s218, 8
      %s222 = sadd.s32 %s220, %s221
      %s223 = smul.addr %s222, 8
      %s224 = scalar_lea.vmem %s0, %s223
      %s225 = smul.u32 4, %s19
      %s226 = smul.u32 4, %s19
      %p227 = scmp.lt.s32.totalorder %s18, 1
      %s228 = scalar_select %p227, %s18, 1
      %p229 = scmp.lt.s32.totalorder %s226, 7
      %s230 = scalar_select %p229, %s226, 7
      %s231 = smul.addr %s228, 8
      %s232 = sadd.s32 %s230, %s231
      %s233 = smul.addr %s232, 2
      %s234 = scalar_lea.vmem %s1, %s233
      %s235 = smul.u32 4, %s19
      %s236 = smul.u32 4, %s19
      %p237 = scmp.lt.s32.totalorder %s18, 1
      %s238 = scalar_select %p237, %s18, 1
      %p239 = scmp.lt.s32.totalorder %s236, 7
      %s240 = scalar_select %p239, %s236, 7
      %s241 = smul.addr %s238, 8
      %s242 = sadd.s32 %s240, %s241
      %s243 = smul.addr %s242, 8
      %s244 = scalar_lea.vmem %s3, %s243
      %s245 = smul.u32 4, %s19
      %v248 = vld [vmem:[%s234] sm:$0x3]
      %v249 = vld [vmem:[%s234 + $0x2] sm:$0x3]
      %v250 = vld [vmem:[%s234 + $0x4] sm:$0x3]
      %v251 = vld [vmem:[%s234 + $0x6] sm:$0x3]
      %vm252 = vnez %v248
      %vm253 = vnez %v249
      %vm254 = vnez %v250
      %vm255 = vnez %v251
      %v256 = vld [vmem:[%s2] sm:$0x1]
      %v257 = vld [vmem:[%s224] sm:$0xff]
      %v258 = vld [vmem:[%s224 + $0x8] sm:$0xff]
      %v259 = vld [vmem:[%s224 + $0x10] sm:$0xff]
      %v260 = vld [vmem:[%s224 + $0x18] sm:$0xff]
      %v261 = vsel %vm252, 16843009, 0
      %v262 = vsel %vm253, 16843009, 0
      %v263 = vsel %vm254, 16843009, 0
      %v264 = vsel %vm255, 16843009, 0
      %v265 = vunpack.c.0.s8 %v261
      %v266 = vunpack.c.0.s8 %v262
      %v267 = vunpack.c.0.s8 %v263
      %v268 = vunpack.c.0.s8 %v264
      %vm269 = vcmp.ne.s32.totalorder %v265, 0
      %vm270 = vcmp.ne.s32.totalorder %v266, 0
      %vm271 = vcmp.ne.s32.totalorder %v267, 0
      %vm272 = vcmp.ne.s32.totalorder %v268, 0
      %v273 = vsel %vm269, 1, 0
      %v274 = vsel %vm270, 1, 0
      %v275 = vsel %vm271, 1, 0
      %v276 = vsel %vm272, 1, 0
      %277 = vset.pattern.permute.xlu0 0
      %278 = vperm.xlu0 %277, %v273
      %v279 = vpop.permute.xlu0 %278
      %280 = vset.pattern.permute.xlu0 0
      %281 = vperm.xlu0 %280, %v274
      %v282 = vpop.permute.xlu0 %281
      %283 = vset.pattern.permute.xlu0 0
      %284 = vperm.xlu0 %283, %v275
      %v285 = vpop.permute.xlu0 %284
      %286 = vset.pattern.permute.xlu0 0
      %287 = vperm.xlu0 %286, %v276
      %v288 = vpop.permute.xlu0 %287
      %vm289 = vcmp.eq.s32.totalorder %v279, 1
      %vm290 = vcmp.eq.s32.totalorder %v282, 1
      %vm291 = vcmp.eq.s32.totalorder %v285, 1
      %vm292 = vcmp.eq.s32.totalorder %v288, 1
      %v294 = vperm.slane %v256, 0
      %v296 = vsel %vm289, %v294, %v257
      %v297 = vsel %vm290, %v294, %v258
      %v298 = vsel %vm291, %v294, %v259
      %v299 = vsel %vm292, %v294, %v260
      %vm300 = vcmask 261120
      %301 = vst.msk [vmem:[%s244] sm:$0xff] %vm300, %v296
      %302 = vst.msk [vmem:[%s244 + $0x8] sm:$0xff] %vm300, %v297
      %303 = vst.msk [vmem:[%s244 + $0x10] sm:$0xff] %vm300, %v298
      %304 = vst.msk [vmem:[%s244 + $0x18] sm:$0xff] %vm300, %v299
      %s305 = smul.u32 4, %s19
      %p306 = scmp.lt.s32.totalorder %s18, 1
      %s307 = scalar_select %p306, %s18, 1
      %p308 = scmp.lt.s32.totalorder %s305, 7
      %s309 = scalar_select %p308, %s305, 7
      %s310 = smul.addr %s307, 8
      %s311 = sadd.s32 %s309, %s310
      %s312 = smul.addr %s311, 8
      %s313 = scalar_lea.vmem %s3, %s312
      // Predicated region
      $region33: #{tpu_custom_call.1} parent=31 // pred_check
        %p314 = pneg %p123
      $region34: #{tpu_custom_call.1} parent=31 // pred_check_branch
        %316 = sbr.rel (%p314) target = $region36
      $region35: #{tpu_custom_call.1} parent=31 // pred_region
        %s317 = smul.u32 4, %s19
      $region36: #{tpu_custom_call.1} parent=31 // pred_fallthru
        _
    $region32: #{tpu_custom_call.1} parent=5 // pred_fallthru
      _
    %p318 = scmp.le.s32.totalorder 2, %s9
    // Predicated region
    $region37: #{tpu_custom_call.1} parent=5 // pred_check
      %p319 = pneg %p318
    $region38: #{tpu_custom_call.1} parent=5 // pred_check_branch
      %321 = sbr.rel (%p319) target = $region40
    $region39: #{tpu_custom_call.1} parent=5 // pred_region
      %s322 = ssub.s32 %s9, 2
      // Predicated region
      $region41: #{tpu_custom_call.1} parent=39 // pred_check
        %p323 = pneg %p129
      $region42: #{tpu_custom_call.1} parent=39 // pred_check_branch
        %325 = sbr.rel (%p323) target = $region44
      $region43: #{tpu_custom_call.1} parent=39 // pred_region
        %s326 = smul.u32 4, %s21
        %p327 = scmp.lt.s32.totalorder %s20, 1
        %s328 = scalar_select %p327, %s20, 1
        %p329 = scmp.lt.s32.totalorder %s326, 7
        %s330 = scalar_select %p329, %s326, 7
        %s331 = smul.addr %s328, 8
        %s332 = sadd.s32 %s330, %s331
        %s333 = smul.addr %s332, 8
        %s334 = scalar_lea.vmem %s3, %s333
      $region44: #{tpu_custom_call.1} parent=39 // pred_fallthru
        _
    $region40: #{tpu_custom_call.1} parent=5 // pred_fallthru
      _
  $region6: #{tpu_custom_call.1} parent=0 // loop_footer
    %s13 = sadd.s32 1, %s9
  $region7: #{tpu_custom_call.1} parent=0 // loop_footer_branch
    %8 = sbr.rel target = $region3
  $region8: #{tpu_custom_call.1} parent=0 // loop_exit
    _

</llo_original>
